<compile_context>
chip_gen: v5e
topology: v5e:2x2
jax: 0.10.0
libtpu: 0.0.40
codegen_flags: <defaults>
</compile_context>

<pallas_src>
import functools

import jax
import jax.numpy as jnp
from jax import lax
from jax.experimental import pallas as pl
from jax.experimental.pallas import tpu as pltpu

BETA = 10.0        # SoftArgMax beta from the module
SIGMA_EPS = 1e-6   # positivity guard for sigmas used inside the Gaussians
LANE = 128


def _round_up(n, m):
    return ((n + m - 1) // m) * m


def _binary_fnet_kernel(x_ref, wb_ref, bb_ref, wh_ref, bh_ref,
                        out_ref, stats_ref, *, F, G, K, C):
    FG = F * G
    CKF = C * K * F
    SF = _round_up(FG, LANE)
    SC = _round_up(CKF, LANE)

    x = x_ref[...]                                   # (B, F)
    B = x.shape[0]
    inv_b = jnp.float32(1.0 / B)

    # ---- backbone: z = tanh(x @ Wb + bb) -----------------------------------
    z = jnp.tanh(
        jnp.dot(x, wb_ref[...], preferred_element_type=jnp.float32) + bb_ref[...]
    )                                                # (B, H)

    # ---- batch mean first, then ONE fused head matmul ----------------------
    # mean(z @ W + b, axis=0) == mean(z, 0) @ W + b   (mean is linear)
    zbar = jnp.sum(z, axis=0, keepdims=True) * inv_b                         # (1, H)
    heads = (jnp.dot(zbar, wh_ref[...], preferred_element_type=jnp.float32)
             + bh_ref[...])                                                  # (1, NH)
    # Raw fgp/cmfp batch means (padded, lane-dense) — single output store.
    stats_ref[...] = heads

    fgp_mu = heads[:, 0:FG]                          # (1, FG)
    fgp_sg = heads[:, SF:SF + FG]                    # (1, FG)
    cmfp_mu = heads[:, 2 * SF:2 * SF + CKF]          # (1, CKF)
    cmfp_sg = heads[:, 2 * SF + SC:2 * SF + SC + CKF]

    # Sigma positivity guard for the Gaussians only (raw means are returned).
    # TODO(synk): exact sigma constraint of the Gaussian submodule is unknown.
    inv_fgp_sg = jnp.float32(1.0) / (jnp.abs(fgp_sg) + SIGMA_EPS)
    inv_cmfp_sg = jnp.float32(1.0) / (jnp.abs(cmfp_sg) + SIGMA_EPS)

    # ---- univariate feature Gaussian: fuzzified features (B, FG) -----------
    # x replicated G times per feature via an in-kernel indicator matmul.
    rr = lax.broadcasted_iota(jnp.int32, (F, FG), 0)
    cc = lax.broadcasted_iota(jnp.int32, (F, FG), 1)
    e_xrep = ((cc >= rr * G) & (cc < rr * G + G)).astype(jnp.float32)        # (F, FG)
    x_rep = jnp.dot(x, e_xrep, preferred_element_type=jnp.float32)           # (B, FG)

    d = (x_rep - fgp_mu) * inv_fgp_sg
    fuzz = jnp.exp(-0.5 * d * d)                     # (B, FG), values in (0, 1]

    # ---- SoftArgMax over granules: one fused indicator matmul --------------
    # exp(BETA*fuzz) is bounded (<= e^BETA) because fuzz in (0, 1], so no
    # max-subtraction is needed.
    jj = lax.broadcasted_iota(jnp.int32, (FG, 2 * F), 0)    # granule-row index
    col = lax.broadcasted_iota(jnp.int32, (FG, 2 * F), 1)   # output column
    cf = jnp.where(col < F, col, col - F)                   # feature of this column
    lo = cf * G
    in_seg = (jj >= lo) & (jj < lo + G)
    gran_val = jnp.where(col < F, jnp.float32(1.0), (jj - lo).astype(jnp.float32))
    s_gran = jnp.where(in_seg, gran_val, jnp.float32(0.0))                   # (FG, 2F)

    e = jnp.exp(BETA * fuzz)
    red = jnp.dot(e, s_gran, preferred_element_type=jnp.float32)             # (B, 2F)
    denom = red[:, 0:F]
    numer = red[:, F:2 * F]
    adjectives = numer * pl.reciprocal(denom, approx=True)                   # (B, F)

    # ---- diagonal multivariate class Gaussian + sum over gaussians ---------
    # Pure VPU/XLU/EUP: per-(class, gaussian) lane slices of the (1, CKF)
    # stats row, lane reduce over F, exp — no MXU round trips on this tail.
    summ_cols = []                                   # C entries, each (B, 1)
    for c in range(C):
        s_c = None
        for k in range(K):
            base = (c * K + k) * F
            dv = (adjectives - cmfp_mu[:, base:base + F]) \
                * inv_cmfp_sg[:, base:base + F]                              # (B, F)
            ss = jnp.sum(dv * dv, axis=-1, keepdims=True)                    # (B, 1)
            g = jnp.exp(-0.5 * ss)
            s_c = g if s_c is None else s_c + g
        summ_cols.append(s_c)

    # ---- softmax over classes (numerically stable), on (B,1) columns -------
    m = summ_cols[0]
    for c in range(1, C):
        m = jnp.maximum(m, summ_cols[c])
    es = [jnp.exp(s - m) for s in summ_cols]
    den = es[0]
    for c in range(1, C):
        den = den + es[c]
    inv_den = pl.reciprocal(den, approx=True)
    norm = [ev * inv_den for ev in es]

    # ---- final SoftArgMax over classes (VPU/EUP only) -----------------------
    f2 = [jnp.exp(BETA * nv) for nv in norm]
    fden = f2[0]
    fnum = jnp.zeros_like(f2[0])
    for c in range(1, C):
        fden = fden + f2[c]
        fnum = fnum + jnp.float32(c) * f2[c]
    out_col = fnum * pl.reciprocal(fden, approx=True)                        # (B, 1)

    # Lane-dense (B, 128) output slab: class index in lane 0, zeros elsewhere.
    lane = lax.broadcasted_iota(jnp.int32, out_ref.shape, 1)
    out_ref[...] = jnp.where(lane == 0, out_col, jnp.float32(0.0))


def make_params(key, F, G, K, C, H):
    """Backbone params + fused, 128-lane-padded head weight/bias."""
    FG, CKF = F * G, C * K * F
    SF, SC = _round_up(FG, LANE), _round_up(CKF, LANE)
    NH = 2 * SF + 2 * SC
    f32 = jnp.float32
    ks = jax.random.split(key, 5)

    wb = jax.random.normal(ks[0], (F, H), f32) / jnp.sqrt(F)
    bb = jnp.zeros((1, H), f32)

    wfm = jax.random.normal(ks[1], (H, FG), f32) * 0.2
    bfm = jnp.zeros((FG,), f32)
    wfs = jax.random.normal(ks[2], (H, FG), f32) * 0.02
    bfs = jnp.ones((FG,), f32)            # sigma bias ~1 keeps sigma positive
    wcm = jax.random.normal(ks[3], (H, CKF), f32) * 0.2
    bcm = jnp.ones((CKF,), f32)
    wcs = jax.random.normal(ks[4], (H, CKF), f32) * 0.02
    bcs = jnp.ones((CKF,), f32)           # sigma bias ~1

    w_heads = jnp.zeros((H, NH), f32)
    b_heads = jnp.zeros((1, NH), f32)
    w_heads = w_heads.at[:, 0:FG].set(wfm)
    w_heads = w_heads.at[:, SF:SF + FG].set(wfs)
    w_heads = w_heads.at[:, 2 * SF:2 * SF + CKF].set(wcm)
    w_heads = w_heads.at[:, 2 * SF + SC:2 * SF + SC + CKF].set(wcs)
    b_heads = b_heads.at[0, 0:FG].set(bfm)
    b_heads = b_heads.at[0, SF:SF + FG].set(bfs)
    b_heads = b_heads.at[0, 2 * SF:2 * SF + CKF].set(bcm)
    b_heads = b_heads.at[0, 2 * SF + SC:2 * SF + SC + CKF].set(bcs)

    return (wb, bb, w_heads, b_heads)


@functools.partial(jax.jit, static_argnames=("F", "G", "K", "C"))
def binary_fnet_forward(x, params, *, F, G, K, C):
    B = x.shape[0]
    FG, CKF = F * G, C * K * F
    SF, SC = _round_up(FG, LANE), _round_up(CKF, LANE)
    NH = 2 * SF + 2 * SC
    wb, bb, w_heads, b_heads = params

    kernel = functools.partial(_binary_fnet_kernel, F=F, G=G, K=K, C=C)
    vmem = pl.BlockSpec(memory_space=pltpu.MemorySpace.VMEM)

    out_padded, stats = pl.pallas_call(
        kernel,
        out_shape=(
            jax.ShapeDtypeStruct((B, LANE), jnp.float32),   # soft class index (lane 0)
            jax.ShapeDtypeStruct((1, NH), jnp.float32),     # fused/padded head means
        ),
        in_specs=[vmem] * 5,
        out_specs=(vmem, vmem),
    )(x, wb, bb, w_heads, b_heads)

    output = out_padded[:, 0]                                               # (B,)
    fgp_mu = stats[0, 0:FG]
    fgp_sg = stats[0, SF:SF + FG]
    cmfp_mu = stats[0, 2 * SF:2 * SF + CKF]
    cmfp_sg = stats[0, 2 * SF + SC:2 * SF + SC + CKF]
    fgp = jnp.stack([fgp_mu.reshape(F, G), fgp_sg.reshape(F, G)], axis=-1)   # (F, G, 2)
    cmfp = jnp.stack(
        [cmfp_mu.reshape(C, K, F), cmfp_sg.reshape(C, K, F)], axis=-1
    )                                                                        # (C, K, F, 2)
    return output, fgp, cmfp


# ---------------------------------------------------------------------------
# Pure-JAX reference (torch op ordering: per-sample heads, then batch mean)
# ---------------------------------------------------------------------------
def _softargmax_ref(a, beta):
    w = jax.nn.softmax(beta * a, axis=-1)
    idx = jnp.arange(a.shape[-1], dtype=jnp.float32)
    return jnp.sum(w * idx, axis=-1)


def binary_fnet_reference(x, params, *, F, G, K, C):
    B = x.shape[0]
    FG, CKF = F * G, C * K * F
    SF, SC = _round_up(FG, LANE), _round_up(CKF, LANE)
    wb, bb, wh, bh = params

    z = jnp.tanh(x @ wb + bb)                        # (B, H)
    heads = z @ wh + bh                              # (B, NH) per sample (torch order)
    hm = jnp.mean(heads, axis=0)                     # (NH,)
    fgp_mu = hm[0:FG]
    fgp_sg = hm[SF:SF + FG]
    cmfp_mu = hm[2 * SF:2 * SF + CKF]
    cmfp_sg = hm[2 * SF + SC:2 * SF + SC + CKF]

    x_rep = jnp.repeat(x, G, axis=1)                 # (B, FG) f-major / g-minor
    d = (x_rep - fgp_mu) / (jnp.abs(fgp_sg) + SIGMA_EPS)
    fuzz = jnp.exp(-0.5 * d * d).reshape(B, F, G)
    adjectives = _softargmax_ref(fuzz, BETA)         # (B, F)

    mu = cmfp_mu.reshape(C, K, F)
    sg = jnp.abs(cmfp_sg.reshape(C, K, F)) + SIGMA_EPS
    dv = (adjectives[:, None, None, :] - mu[None]) / sg[None]               # (B, C, K, F)
    assignments = jnp.exp(-0.5 * jnp.sum(dv * dv, axis=-1))                 # (B, C, K)
    summation = jnp.sum(assignments, axis=-1)                               # (B, C)
    normalized = jax.nn.softmax(summation, axis=-1)
    output = _softargmax_ref(normalized, BETA)                              # (B,)

    fgp = jnp.stack([fgp_mu.reshape(F, G), fgp_sg.reshape(F, G)], axis=-1)
    cmfp = jnp.stack([cmfp_mu.reshape(C, K, F), cmfp_sg.reshape(C, K, F)], axis=-1)
    return output, fgp, cmfp


if __name__ == "__main__":
    # small shapes: batch=2, in_features=4, granularity=3, num_gaussians=2,
    # num_classes=2, backbone hidden=32
    B, F, G, K, C, H = 2, 4, 3, 2, 2, 32

    key = jax.random.PRNGKey(0)
    kx, kp = jax.random.split(key)
    x = jax.random.normal(kx, (B, F), jnp.float32)

    params = make_params(kp, F, G, K, C, H)

    output, fgp, cmfp = binary_fnet_forward(x, params, F=F, G=G, K=K, C=C)
    jax.block_until_ready((output, fgp, cmfp))

    # Shape / finiteness / range checks.
    assert output.shape == (B,)
    assert fgp.shape == (F, G, 2)
    assert cmfp.shape == (C, K, F, 2)
    assert bool(jnp.all(jnp.isfinite(output)))
    assert bool(jnp.all(jnp.isfinite(fgp)))
    assert bool(jnp.all(jnp.isfinite(cmfp)))
    assert bool(jnp.all((output >= 0.0) & (output <= float(C - 1))))

    # Numeric check against the pure-JAX reference.  Tolerances are loose
    # because the kernel uses EUP approx reciprocals and Mosaic-vs-XLA f32
    # matmul precision defaults may differ; structural bugs produce errors
    # orders of magnitude larger than these bounds.
    ref_out, ref_fgp, ref_cmfp = binary_fnet_reference(x, params, F=F, G=G, K=K, C=C)
    assert bool(jnp.allclose(fgp, ref_fgp, atol=3e-2, rtol=3e-2))
    assert bool(jnp.allclose(cmfp, ref_cmfp, atol=3e-2, rtol=3e-2))
    assert bool(jnp.allclose(output, ref_out, atol=1e-1, rtol=0.0))

    print("KERNEL_OK")
</pallas_src>

<mosaic_0001>
module attributes {stable_mosaic.version = 11 : i64} {
  func.func @_binary_fnet_kernel(%arg0: memref<2x4xf32, #tpu.memory_space<vmem>>, %arg1: memref<4x32xf32, #tpu.memory_space<vmem>>, %arg2: memref<1x32xf32, #tpu.memory_space<vmem>>, %arg3: memref<32x512xf32, #tpu.memory_space<vmem>>, %arg4: memref<1x512xf32, #tpu.memory_space<vmem>>, %arg5: memref<2x128xf32, #tpu.memory_space<vmem>>, %arg6: memref<1x512xf32, #tpu.memory_space<vmem>>) attributes {dimension_semantics = [], scalar_prefetch = 0 : i64, scratch_operands = 0 : i64, tpu.core_type = #tpu.core_type<tc>} {
    %c0 = arith.constant 0 : index
    %c0_0 = arith.constant 0 : index
    %0 = vector.load %arg0[%c0, %c0_0] : memref<2x4xf32, #tpu.memory_space<vmem>>, vector<2x4xf32>
    %c0_1 = arith.constant 0 : index
    %c0_2 = arith.constant 0 : index
    %1 = vector.load %arg1[%c0_1, %c0_2] : memref<4x32xf32, #tpu.memory_space<vmem>>, vector<4x32xf32>
    %cst = arith.constant dense<0.000000e+00> : vector<2x32xf32>
    %2 = tpu.matmul %0, %1, %cst {dimension_numbers = #tpu.dot_dimension_numbers<[1], [0], [0], [1], [0, 0, 1, 1], [], []>} : vector<2x4xf32>, vector<4x32xf32>, vector<2x32xf32> -> vector<2x32xf32>
    %c0_3 = arith.constant 0 : index
    %c0_4 = arith.constant 0 : index
    %3 = vector.load %arg2[%c0_3, %c0_4] : memref<1x32xf32, #tpu.memory_space<vmem>>, vector<1x32xf32>
    %4 = vector.broadcast %3 : vector<1x32xf32> to vector<2x32xf32>
    %5 = arith.addf %2, %4 : vector<2x32xf32>
    %6 = math.tanh %5 : vector<2x32xf32>
    %cst_5 = arith.constant dense<0.000000e+00> : vector<32xf32>
    %7 = vector.multi_reduction <add>, %6, %cst_5 [0] : vector<2x32xf32> to vector<32xf32>
    %8 = vector.shape_cast %7 : vector<32xf32> to vector<1x32xf32>
    %cst_6 = arith.constant 5.000000e-01 : f32
    %9 = vector.broadcast %cst_6 : f32 to vector<1x32xf32>
    %10 = arith.mulf %8, %9 : vector<1x32xf32>
    %c0_7 = arith.constant 0 : index
    %c0_8 = arith.constant 0 : index
    %11 = vector.load %arg3[%c0_7, %c0_8] : memref<32x512xf32, #tpu.memory_space<vmem>>, vector<32x512xf32>
    %cst_9 = arith.constant dense<0.000000e+00> : vector<1x512xf32>
    %12 = tpu.matmul %10, %11, %cst_9 {dimension_numbers = #tpu.dot_dimension_numbers<[1], [0], [0], [1], [0, 0, 1, 1], [], []>} : vector<1x32xf32>, vector<32x512xf32>, vector<1x512xf32> -> vector<1x512xf32>
    %c0_10 = arith.constant 0 : index
    %c0_11 = arith.constant 0 : index
    %13 = vector.load %arg4[%c0_10, %c0_11] : memref<1x512xf32, #tpu.memory_space<vmem>>, vector<1x512xf32>
    %14 = arith.addf %12, %13 : vector<1x512xf32>
    %c0_12 = arith.constant 0 : index
    %c0_13 = arith.constant 0 : index
    %15 = vector.load %arg6[%c0_12, %c0_13] : memref<1x512xf32, #tpu.memory_space<vmem>>, vector<1x512xf32>
    tpu.vector_store %arg6[%c0_12, %c0_13], %14 {strides = array<i32>} : memref<1x512xf32, #tpu.memory_space<vmem>>, vector<1x512xf32>,
    %16 = vector.extract_strided_slice %14 {offsets = [0, 0], sizes = [1, 12], strides = [1, 1]} : vector<1x512xf32> to vector<1x12xf32>
    %17 = vector.extract_strided_slice %14 {offsets = [0, 128], sizes = [1, 12], strides = [1, 1]} : vector<1x512xf32> to vector<1x12xf32>
    %18 = vector.extract_strided_slice %14 {offsets = [0, 256], sizes = [1, 16], strides = [1, 1]} : vector<1x512xf32> to vector<1x16xf32>
    %19 = vector.extract_strided_slice %14 {offsets = [0, 384], sizes = [1, 16], strides = [1, 1]} : vector<1x512xf32> to vector<1x16xf32>
    %20 = math.absf %17 : vector<1x12xf32>
    %cst_14 = arith.constant 9.99999997E-7 : f32
    %21 = vector.broadcast %cst_14 : f32 to vector<1x12xf32>
    %22 = arith.addf %20, %21 : vector<1x12xf32>
    %cst_15 = arith.constant 1.000000e+00 : f32
    %23 = vector.broadcast %cst_15 : f32 to vector<1x12xf32>
    %24 = arith.divf %23, %22 : vector<1x12xf32>
    %25 = math.absf %19 : vector<1x16xf32>
    %cst_16 = arith.constant 9.99999997E-7 : f32
    %26 = vector.broadcast %cst_16 : f32 to vector<1x16xf32>
    %27 = arith.addf %25, %26 : vector<1x16xf32>
    %cst_17 = arith.constant 1.000000e+00 : f32
    %28 = vector.broadcast %cst_17 : f32 to vector<1x16xf32>
    %29 = arith.divf %28, %27 : vector<1x16xf32>
    %30 = tpu.iota {dimensions = array<i32: 0>} : vector<4x12xi32>
    %31 = tpu.iota {dimensions = array<i32: 1>} : vector<4x12xi32>
    %c3_i32 = arith.constant 3 : i32
    %32 = vector.broadcast %c3_i32 : i32 to vector<4x12xi32>
    %33 = arith.muli %30, %32 : vector<4x12xi32>
    %34 = arith.cmpi sge, %31, %33 : vector<4x12xi32>
    %c3_i32_18 = arith.constant 3 : i32
    %35 = vector.broadcast %c3_i32_18 : i32 to vector<4x12xi32>
    %36 = arith.muli %30, %35 : vector<4x12xi32>
    %c3_i32_19 = arith.constant 3 : i32
    %37 = vector.broadcast %c3_i32_19 : i32 to vector<4x12xi32>
    %38 = arith.addi %36, %37 : vector<4x12xi32>
    %39 = arith.cmpi slt, %31, %38 : vector<4x12xi32>
    %40 = arith.andi %34, %39 : vector<4x12xi1>
    %41 = arith.extui %40 : vector<4x12xi1> to vector<4x12xi32>
    %42 = arith.sitofp %41 : vector<4x12xi32> to vector<4x12xf32>
    %cst_20 = arith.constant dense<0.000000e+00> : vector<2x12xf32>
    %43 = tpu.matmul %0, %42, %cst_20 {dimension_numbers = #tpu.dot_dimension_numbers<[1], [0], [0], [1], [0, 0, 1, 1], [], []>} : vector<2x4xf32>, vector<4x12xf32>, vector<2x12xf32> -> vector<2x12xf32>
    %44 = vector.broadcast %16 : vector<1x12xf32> to vector<2x12xf32>
    %45 = arith.subf %43, %44 : vector<2x12xf32>
    %46 = vector.broadcast %24 : vector<1x12xf32> to vector<2x12xf32>
    %47 = arith.mulf %45, %46 : vector<2x12xf32>
    %cst_21 = arith.constant -5.000000e-01 : f32
    %48 = vector.broadcast %cst_21 : f32 to vector<2x12xf32>
    %49 = arith.mulf %48, %47 : vector<2x12xf32>
    %50 = arith.mulf %49, %47 : vector<2x12xf32>
    %51 = math.exp %50 : vector<2x12xf32>
    %52 = tpu.iota {dimensions = array<i32: 0>} : vector<12x8xi32>
    %53 = tpu.iota {dimensions = array<i32: 1>} : vector<12x8xi32>
    %c4_i32 = arith.constant 4 : i32
    %54 = vector.broadcast %c4_i32 : i32 to vector<12x8xi32>
    %55 = arith.cmpi slt, %53, %54 : vector<12x8xi32>
    %c4_i32_22 = arith.constant 4 : i32
    %56 = vector.broadcast %c4_i32_22 : i32 to vector<12x8xi32>
    %57 = arith.subi %53, %56 : vector<12x8xi32>
    %58 = arith.select %55, %53, %57 : vector<12x8xi1>, vector<12x8xi32>
    %c3_i32_23 = arith.constant 3 : i32
    %59 = vector.broadcast %c3_i32_23 : i32 to vector<12x8xi32>
    %60 = arith.muli %58, %59 : vector<12x8xi32>
    %61 = arith.cmpi sge, %52, %60 : vector<12x8xi32>
    %c3_i32_24 = arith.constant 3 : i32
    %62 = vector.broadcast %c3_i32_24 : i32 to vector<12x8xi32>
    %63 = arith.addi %60, %62 : vector<12x8xi32>
    %64 = arith.cmpi slt, %52, %63 : vector<12x8xi32>
    %65 = arith.andi %61, %64 : vector<12x8xi1>
    %c4_i32_25 = arith.constant 4 : i32
    %66 = vector.broadcast %c4_i32_25 : i32 to vector<12x8xi32>
    %67 = arith.cmpi slt, %53, %66 : vector<12x8xi32>
    %68 = arith.subi %52, %60 : vector<12x8xi32>
    %69 = arith.sitofp %68 : vector<12x8xi32> to vector<12x8xf32>
    %cst_26 = arith.constant 1.000000e+00 : f32
    %70 = vector.broadcast %cst_26 : f32 to vector<12x8xf32>
    %71 = arith.select %67, %70, %69 : vector<12x8xi1>, vector<12x8xf32>
    %cst_27 = arith.constant 0.000000e+00 : f32
    %72 = vector.broadcast %cst_27 : f32 to vector<12x8xf32>
    %73 = arith.select %65, %71, %72 : vector<12x8xi1>, vector<12x8xf32>
    %cst_28 = arith.constant 1.000000e+01 : f32
    %74 = vector.broadcast %cst_28 : f32 to vector<2x12xf32>
    %75 = arith.mulf %74, %51 : vector<2x12xf32>
    %76 = math.exp %75 : vector<2x12xf32>
    %cst_29 = arith.constant dense<0.000000e+00> : vector<2x8xf32>
    %77 = tpu.matmul %76, %73, %cst_29 {dimension_numbers = #tpu.dot_dimension_numbers<[1], [0], [0], [1], [0, 0, 1, 1], [], []>} : vector<2x12xf32>, vector<12x8xf32>, vector<2x8xf32> -> vector<2x8xf32>
    %78 = vector.extract_strided_slice %77 {offsets = [0, 0], sizes = [2, 4], strides = [1, 1]} : vector<2x8xf32> to vector<2x4xf32>
    %79 = vector.extract_strided_slice %77 {offsets = [0, 4], sizes = [2, 4], strides = [1, 1]} : vector<2x8xf32> to vector<2x4xf32>
    %80 = tpu.reciprocal %78 {approx = true} : vector<2x4xf32> -> vector<2x4xf32>
    %81 = arith.mulf %79, %80 : vector<2x4xf32>
    %82 = vector.extract_strided_slice %18 {offsets = [0, 0], sizes = [1, 4], strides = [1, 1]} : vector<1x16xf32> to vector<1x4xf32>
    %83 = vector.broadcast %82 : vector<1x4xf32> to vector<2x4xf32>
    %84 = arith.subf %81, %83 : vector<2x4xf32>
    %85 = vector.extract_strided_slice %29 {offsets = [0, 0], sizes = [1, 4], strides = [1, 1]} : vector<1x16xf32> to vector<1x4xf32>
    %86 = vector.broadcast %85 : vector<1x4xf32> to vector<2x4xf32>
    %87 = arith.mulf %84, %86 : vector<2x4xf32>
    %88 = arith.mulf %87, %87 : vector<2x4xf32>
    %cst_30 = arith.constant dense<0.000000e+00> : vector<2xf32>
    %89 = vector.multi_reduction <add>, %88, %cst_30 [1] : vector<2x4xf32> to vector<2xf32>
    %90 = vector.shape_cast %89 : vector<2xf32> to vector<2x1xf32>
    %cst_31 = arith.constant -5.000000e-01 : f32
    %91 = vector.broadcast %cst_31 : f32 to vector<2x1xf32>
    %92 = arith.mulf %91, %90 : vector<2x1xf32>
    %93 = math.exp %92 : vector<2x1xf32>
    %94 = vector.extract_strided_slice %18 {offsets = [0, 4], sizes = [1, 4], strides = [1, 1]} : vector<1x16xf32> to vector<1x4xf32>
    %95 = vector.broadcast %94 : vector<1x4xf32> to vector<2x4xf32>
    %96 = arith.subf %81, %95 : vector<2x4xf32>
    %97 = vector.extract_strided_slice %29 {offsets = [0, 4], sizes = [1, 4], strides = [1, 1]} : vector<1x16xf32> to vector<1x4xf32>
    %98 = vector.broadcast %97 : vector<1x4xf32> to vector<2x4xf32>
    %99 = arith.mulf %96, %98 : vector<2x4xf32>
    %100 = arith.mulf %99, %99 : vector<2x4xf32>
    %cst_32 = arith.constant dense<0.000000e+00> : vector<2xf32>
    %101 = vector.multi_reduction <add>, %100, %cst_32 [1] : vector<2x4xf32> to vector<2xf32>
    %102 = vector.shape_cast %101 : vector<2xf32> to vector<2x1xf32>
    %cst_33 = arith.constant -5.000000e-01 : f32
    %103 = vector.broadcast %cst_33 : f32 to vector<2x1xf32>
    %104 = arith.mulf %103, %102 : vector<2x1xf32>
    %105 = math.exp %104 : vector<2x1xf32>
    %106 = arith.addf %93, %105 : vector<2x1xf32>
    %107 = vector.extract_strided_slice %18 {offsets = [0, 8], sizes = [1, 4], strides = [1, 1]} : vector<1x16xf32> to vector<1x4xf32>
    %108 = vector.broadcast %107 : vector<1x4xf32> to vector<2x4xf32>
    %109 = arith.subf %81, %108 : vector<2x4xf32>
    %110 = vector.extract_strided_slice %29 {offsets = [0, 8], sizes = [1, 4], strides = [1, 1]} : vector<1x16xf32> to vector<1x4xf32>
    %111 = vector.broadcast %110 : vector<1x4xf32> to vector<2x4xf32>
    %112 = arith.mulf %109, %111 : vector<2x4xf32>
    %113 = arith.mulf %112, %112 : vector<2x4xf32>
    %cst_34 = arith.constant dense<0.000000e+00> : vector<2xf32>
    %114 = vector.multi_reduction <add>, %113, %cst_34 [1] : vector<2x4xf32> to vector<2xf32>
    %115 = vector.shape_cast %114 : vector<2xf32> to vector<2x1xf32>
    %cst_35 = arith.constant -5.000000e-01 : f32
    %116 = vector.broadcast %cst_35 : f32 to vector<2x1xf32>
    %117 = arith.mulf %116, %115 : vector<2x1xf32>
    %118 = math.exp %117 : vector<2x1xf32>
    %119 = vector.extract_strided_slice %18 {offsets = [0, 12], sizes = [1, 4], strides = [1, 1]} : vector<1x16xf32> to vector<1x4xf32>
    %120 = vector.broadcast %119 : vector<1x4xf32> to vector<2x4xf32>
    %121 = arith.subf %81, %120 : vector<2x4xf32>
    %122 = vector.extract_strided_slice %29 {offsets = [0, 12], sizes = [1, 4], strides = [1, 1]} : vector<1x16xf32> to vector<1x4xf32>
    %123 = vector.broadcast %122 : vector<1x4xf32> to vector<2x4xf32>
    %124 = arith.mulf %121, %123 : vector<2x4xf32>
    %125 = arith.mulf %124, %124 : vector<2x4xf32>
    %cst_36 = arith.constant dense<0.000000e+00> : vector<2xf32>
    %126 = vector.multi_reduction <add>, %125, %cst_36 [1] : vector<2x4xf32> to vector<2xf32>
    %127 = vector.shape_cast %126 : vector<2xf32> to vector<2x1xf32>
    %cst_37 = arith.constant -5.000000e-01 : f32
    %128 = vector.broadcast %cst_37 : f32 to vector<2x1xf32>
    %129 = arith.mulf %128, %127 : vector<2x1xf32>
    %130 = math.exp %129 : vector<2x1xf32>
    %131 = arith.addf %118, %130 : vector<2x1xf32>
    %132 = arith.maximumf %106, %131 : vector<2x1xf32>
    %133 = arith.subf %106, %132 : vector<2x1xf32>
    %134 = math.exp %133 : vector<2x1xf32>
    %135 = arith.subf %131, %132 : vector<2x1xf32>
    %136 = math.exp %135 : vector<2x1xf32>
    %137 = arith.addf %134, %136 : vector<2x1xf32>
    %138 = tpu.reciprocal %137 {approx = true} : vector<2x1xf32> -> vector<2x1xf32>
    %139 = arith.mulf %134, %138 : vector<2x1xf32>
    %140 = arith.mulf %136, %138 : vector<2x1xf32>
    %cst_38 = arith.constant 1.000000e+01 : f32
    %141 = vector.broadcast %cst_38 : f32 to vector<2x1xf32>
    %142 = arith.mulf %141, %139 : vector<2x1xf32>
    %143 = math.exp %142 : vector<2x1xf32>
    %cst_39 = arith.constant 1.000000e+01 : f32
    %144 = vector.broadcast %cst_39 : f32 to vector<2x1xf32>
    %145 = arith.mulf %144, %140 : vector<2x1xf32>
    %146 = math.exp %145 : vector<2x1xf32>
    %cst_40 = arith.constant 0.000000e+00 : f32
    %147 = vector.broadcast %cst_40 : f32 to vector<2x1xf32>
    %148 = arith.addf %143, %146 : vector<2x1xf32>
    %cst_41 = arith.constant 1.000000e+00 : f32
    %149 = vector.broadcast %cst_41 : f32 to vector<2x1xf32>
    %150 = arith.mulf %149, %146 : vector<2x1xf32>
    %151 = arith.addf %147, %150 : vector<2x1xf32>
    %152 = tpu.reciprocal %148 {approx = true} : vector<2x1xf32> -> vector<2x1xf32>
    %153 = arith.mulf %151, %152 : vector<2x1xf32>
    %154 = tpu.iota {dimensions = array<i32: 1>} : vector<2x128xi32>
    %c0_i32 = arith.constant 0 : i32
    %155 = vector.broadcast %c0_i32 : i32 to vector<2x128xi32>
    %156 = arith.cmpi eq, %154, %155 : vector<2x128xi32>
    %cst_42 = arith.constant 0.000000e+00 : f32
    %157 = vector.shape_cast %153 : vector<2x1xf32> to vector<2x1xf32>
    %158 = vector.broadcast %157 : vector<2x1xf32> to vector<2x128xf32>
    %159 = vector.broadcast %cst_42 : f32 to vector<2x128xf32>
    %160 = arith.select %156, %158, %159 : vector<2x128xi1>, vector<2x128xf32>
    %c0_43 = arith.constant 0 : index
    %c0_44 = arith.constant 0 : index
    %161 = vector.load %arg5[%c0_43, %c0_44] : memref<2x128xf32, #tpu.memory_space<vmem>>, vector<2x128xf32>
    tpu.vector_store %arg5[%c0_43, %c0_44], %160 {strides = array<i32>} : memref<2x128xf32, #tpu.memory_space<vmem>>, vector<2x128xf32>,
    return
  }
}

</mosaic_0001>

<llo_original>
// kernel: squeeze.7
$region0: #{squeeze.7}
  %s0 = inlined_call_operand.vmem [shape: f32[12], index: 0, kind: input, shape index: {}]
  %s1 = inlined_call_operand.vmem [shape: f32[4,3,1], index: 1, kind: output, shape index: {}]
  $region1: #{squeeze.7} parent=0
    #allocation0 [shape = 'u8[4096]{0}', space=vmem, size = 0x1000, scoped, tag = 'scoped mem for output reshape']
    #allocation1 [shape = 'u8[4096]{0}', space=vmem, size = 0x1000, scoped, tag = 'scoped mem for input reshape']
    %s3 = ssub.s32 2, 1
    %v4 = vld [vmem:[%s0] sm:%s3]
    %5 = vst [vmem:[#allocation1] sm:%s3] %v4
    %v6 = vld [vmem:[#allocation1] sm:$0x1]
    %vm7 = vcmask 23552
    %8 = vst.msk [vmem:[#allocation0] sm:$0x1] %vm7, %v6
    %v9 = vld [vmem:[#allocation1] sm:$0x1]
    %10 = vrot.lane.b32.xlu0 %v9, 125
    %v11 = vpop.permute.xlu0 %10
    %vm12 = vcmask 23552
    %s13 = scalar_lea.vmem [#allocation0], 1
    %14 = vst.msk [vmem:[%s13] sm:$0x1] %vm12, %v11
    %v15 = vld [vmem:[#allocation1] sm:$0x1]
    %16 = vrot.lane.b32.xlu0 %v15, 122
    %v17 = vpop.permute.xlu0 %16
    %vm18 = vcmask 23552
    %s19 = scalar_lea.vmem [#allocation0], 2
    %20 = vst.msk [vmem:[%s19] sm:$0x1] %vm18, %v17
    %v21 = vld [vmem:[#allocation1] sm:$0x1]
    %22 = vrot.lane.b32.xlu0 %v21, 119
    %v23 = vpop.permute.xlu0 %22
    %vm24 = vcmask 23552
    %s25 = scalar_lea.vmem [#allocation0], 3
    %26 = vst.msk [vmem:[%s25] sm:$0x1] %vm24, %v23
    %s28 = ssub.s32 16, 1
    %v29 = vld [vmem:[#allocation0] sm:%s28]
    %s31 = ssub.s32 16, 1
    %32 = vst [vmem:[%s1] sm:%s31] %v29

// kernel: squeeze.9
$region0: #{squeeze.9}
  %s0 = inlined_call_operand.vmem [shape: f32[16], index: 0, kind: input, shape index: {}]
  %s1 = inlined_call_operand.vmem [shape: f32[2,2,4,1], index: 1, kind: output, shape index: {}]
  $region1: #{squeeze.9} parent=0
    #allocation0 [shape = 'u8[8192]{0}', space=vmem, size = 0x2000, scoped, tag = 'scoped mem for output reshape']
    #allocation1 [shape = 'u8[4096]{0}', space=vmem, size = 0x1000, scoped, tag = 'scoped mem for input reshape']
    %s3 = ssub.s32 2, 1
    %v4 = vld [vmem:[%s0] sm:%s3]
    %5 = vst [vmem:[#allocation1] sm:%s3] %v4
    %v6 = vld [vmem:[#allocation1] sm:$0x1]
    %vm7 = vcmask 31744
    %8 = vst.msk [vmem:[#allocation0] sm:$0x1] %vm7, %v6
    %v9 = vld [vmem:[#allocation1] sm:$0x1]
    %10 = vrot.lane.b32.xlu0 %v9, 124
    %v11 = vpop.permute.xlu0 %10
    %vm12 = vcmask 31744
    %s13 = scalar_lea.vmem [#allocation0], 1
    %14 = vst.msk [vmem:[%s13] sm:$0x1] %vm12, %v11
    %v15 = vld [vmem:[#allocation1] sm:$0x1]
    %16 = vrot.lane.b32.xlu0 %v15, 120
    %v17 = vpop.permute.xlu0 %16
    %vm18 = vcmask 31744
    %s19 = scalar_lea.vmem [#allocation0], 8
    %20 = vst.msk [vmem:[%s19] sm:$0x1] %vm18, %v17
    %v21 = vld [vmem:[#allocation1] sm:$0x1]
    %22 = vrot.lane.b32.xlu0 %v21, 116
    %v23 = vpop.permute.xlu0 %22
    %vm24 = vcmask 31744
    %s25 = scalar_lea.vmem [#allocation0], 9
    %26 = vst.msk [vmem:[%s25] sm:$0x1] %vm24, %v23
    %s28 = ssub.s32 4, 1
    %v29 = vld [vmem:[#allocation0] sm:%s28]
    %s31 = ssub.s32 4, 1
    %32 = vst [vmem:[%s1] sm:%s31] %v29
    %s33 = scalar_lea.vmem [#allocation0], 8
    %v34 = vld [vmem:[%s33] sm:%s28]
    %s36 = ssub.s32 4, 1
    %s37 = scalar_lea.vmem %s1, 2
    %38 = vst [vmem:[%s37] sm:%s36] %v34

// kernel: binary_fnet_forward.1
$region0: #{binary_fnet_forward.1}
  #allocation0 [shape = 'u32[]', space=smem, size = 0x4, offset = 0x4, fixed_abs, tag = 'smem constant byte address 0x4 - core index']
  #allocation1 [shape = 'u32[72,128]{1,0:T(1,128)}', space=vmem, size = 0x9000, scoped, tag = 'internal scratch']
  %s0 = inlined_call_operand.vmem [shape: f32[2,4], index: 0, kind: input, shape index: {}]
  %s1 = inlined_call_operand.hbm [shape: f32[4,32], index: 1, kind: input, shape index: {}]
  %s2 = inlined_call_operand.vmem [shape: f32[1,32], index: 2, kind: input, shape index: {}]
  %s3 = inlined_call_operand.hbm [shape: f32[32,512], index: 3, kind: input, shape index: {}]
  %s4 = inlined_call_operand.hbm [shape: f32[1,512], index: 4, kind: input, shape index: {}]
  %s5 = inlined_call_operand.vmem [shape: f32[2,128], index: 5, kind: output, shape index: {0}]
  %s6 = inlined_call_operand.vmem [shape: f32[1,512], index: 6, kind: output, shape index: {1}]
  %7 = xla_tuple %s5, %s6
  %s8 = sld [smem:[#allocation0]]
  $region50: #{binary_fnet_forward.1} parent=0
    _
  %s10 = ssub.s32 1, %s8
  %s11 = scalar_select 0, %s10, %s8
  $region1: #{binary_fnet_forward.1} parent=0
    #allocation2 [shape = 'u8[2048]{0}', space=vmem, size = 0x800, scoped, tag = 'input window, operand 1, single buffered']
    #allocation3 [shape = 's32[1]{0}', space=sflag, size = 0x4, scoped, tag = 'scoped memory for binary_fnet_forward.1']
    #allocation4 [shape = 'u8[65536]{0}', space=vmem, size = 0x10000, scoped, tag = 'input window, operand 3, single buffered']
    #allocation5 [shape = 's32[1]{0}', space=sflag, size = 0x4, scoped, tag = 'scoped memory for binary_fnet_forward.1']
    #allocation6 [shape = 'u8[2048]{0}', space=vmem, size = 0x800, scoped, tag = 'input window, operand 4, single buffered']
    %12 = vsyncpa [#allocation3], 0
    %13 = vsyncpa [#allocation5], 0
    // Predicated region
    $region2: #{binary_fnet_forward.1} parent=1 // pred_check
      _
    $region3: #{binary_fnet_forward.1} parent=1 // pred_check_branch
      %15 = sbr.rel (0) target = $region5
    $region4: #{binary_fnet_forward.1} parent=1 // pred_region
      _
    $region5: #{binary_fnet_forward.1} parent=1 // pred_fallthru
      _
    // Predicated region
    $region6: #{binary_fnet_forward.1} parent=1 // pred_check
      _
    $region7: #{binary_fnet_forward.1} parent=1 // pred_check_branch
      %17 = sbr.rel (0) target = $region9
    $region8: #{binary_fnet_forward.1} parent=1 // pred_region
      %19 = vsyncadd [#allocation3], 0
      %s21 = sshll.u32 %s1, 4
      %s22 = int_to_ptr.hbm [resolvable:$true] %s21
      %s23 = sshll.u32 [#allocation2], 4
      %s24 = int_to_ptr.vmem [resolvable:$true] %s23
      %26 = dma.hbm_to_vmem [thread:$0]  %s22, 64, %s24, [#allocation3]
    $region9: #{binary_fnet_forward.1} parent=1 // pred_fallthru
      _
    // Predicated region
    $region10: #{binary_fnet_forward.1} parent=1 // pred_check
      _
    $region11: #{binary_fnet_forward.1} parent=1 // pred_check_branch
      %28 = sbr.rel (0) target = $region13
    $region12: #{binary_fnet_forward.1} parent=1 // pred_region
      _
    $region13: #{binary_fnet_forward.1} parent=1 // pred_fallthru
      _
    // Predicated region
    $region14: #{binary_fnet_forward.1} parent=1 // pred_check
      _
    $region15: #{binary_fnet_forward.1} parent=1 // pred_check_branch
      %30 = sbr.rel (0) target = $region17
    $region16: #{binary_fnet_forward.1} parent=1 // pred_region
      %32 = vsyncadd [#allocation5], 0
      %s33 = sshll.u32 %s3, 4
      %s34 = int_to_ptr.hbm [resolvable:$true] %s33
      %s35 = sshll.u32 [#allocation4], 4
      %s36 = int_to_ptr.vmem [resolvable:$true] %s35
      %41 = dma.hbm_to_vmem [thread:$0]  %s34, 2048, %s36, [#allocation5], 512, 512, 32
    $region17: #{binary_fnet_forward.1} parent=1 // pred_fallthru
      _
    // Predicated region
    $region18: #{binary_fnet_forward.1} parent=1 // pred_check
      _
    $region19: #{binary_fnet_forward.1} parent=1 // pred_check_branch
      %43 = sbr.rel (0) target = $region21
    $region20: #{binary_fnet_forward.1} parent=1 // pred_region
      %45 = vsyncadd [#allocation5], 0
      %s47 = sshll.u32 %s4, 4
      %s48 = int_to_ptr.hbm [resolvable:$true] %s47
      %s49 = sshll.u32 [#allocation6], 4
      %s50 = int_to_ptr.vmem [resolvable:$true] %s49
      %52 = dma.hbm_to_vmem [thread:$0]  %s48, 64, %s50, [#allocation5]
    $region21: #{binary_fnet_forward.1} parent=1 // pred_fallthru
      _
    // Predicated region
    $region22: #{binary_fnet_forward.1} parent=1 // pred_check
      _
    $region23: #{binary_fnet_forward.1} parent=1 // pred_check_branch
      %54 = sbr.rel (0) target = $region25
    $region24: #{binary_fnet_forward.1} parent=1 // pred_region
      %56 = dma.done [#allocation3], 64
    $region25: #{binary_fnet_forward.1} parent=1 // pred_fallthru
      _
    // Predicated region
    $region26: #{binary_fnet_forward.1} parent=1 // pred_check
      _
    $region27: #{binary_fnet_forward.1} parent=1 // pred_check_branch
      %58 = sbr.rel (0) target = $region29
    $region28: #{binary_fnet_forward.1} parent=1 // pred_region
      %60 = dma.done [#allocation5], 2048
    $region29: #{binary_fnet_forward.1} parent=1 // pred_fallthru
      _
    // Predicated region
    $region30: #{binary_fnet_forward.1} parent=1 // pred_check
      _
    $region31: #{binary_fnet_forward.1} parent=1 // pred_check_branch
      %62 = sbr.rel (0) target = $region33
    $region32: #{binary_fnet_forward.1} parent=1 // pred_region
      %64 = dma.done [#allocation5], 64
    $region33: #{binary_fnet_forward.1} parent=1 // pred_fallthru
      _
    %v65 = vld [vmem:[%s0] sm:$0x3]
    %v66 = vld [vmem:[#allocation2] sm:$0xf]
    %v67 = vld [vmem:[%s2] sm:$0x1]
    %v69 = vperm.slane %v67, 0
    %vm71 = vcmask 31744
    %v73 = vsel %vm71, %v65, 0
    %vm75 = vcmask 1043456
    %v77 = vsel %vm75, %v66, 0
    %79 = vmatpush.msra.mxu0 0.0
    %80 = vmatpush.msra.mxu0 0.0
    %81 = vmatpush.msra.mxu0 0.0
    %82 = vmatpush.msra.mxu0 0.0
    %83 = vmatpush.msra.mxu0 0.0
    %84 = vmatpush.msra.mxu0 0.0
    %85 = vmatpush.msra.mxu0 0.0
    %86 = vmatpush.msra.mxu0 0.0
    %87 = vmatpush.msra.mxu0 0.0
    %88 = vmatpush.msra.mxu0 0.0
    %89 = vmatpush.msra.mxu0 0.0
    %90 = vmatpush.msra.mxu0 0.0
    %91 = vmatpush.msra.mxu0 0.0
    %92 = vmatpush.msra.mxu0 0.0
    %93 = vmatpush.msra.mxu0 0.0
    %94 = vmatpush.msra.mxu0 %v77
    %95 = vmatmul.f32.gmra.mxu0 %v73
    %v96 = vpop.f32.mrf.mxu0
    %v97 = vadd.f32 %v69, %v96
    %98 = vdwg.mxu0
    %v99 = vtanh.pop %v97
    %vm100 = vcmask 254976
    %v101 = vsel %vm100, %v99, 0.0
    %v102 = vrot.slane %v101, 4
    %v103 = vadd.f32 %v101, %v102
    %v104 = vrot.slane %v103, 2
    %v105 = vadd.f32 %v103, %v104
    %v106 = vrot.slane %v105, 1
    %v107 = vadd.f32 %v105, %v106
    %v108 = vmul.f32 %v107, 0.5
    %v109 = vld [vmem:[#allocation4] sm:$0xff]
    %v110 = vld [vmem:[#allocation4 + $0x8] sm:$0xff]
    %v111 = vld [vmem:[#allocation4 + $0x10] sm:$0xff]
    %v112 = vld [vmem:[#allocation4 + $0x18] sm:$0xff]
    %v113 = vld [vmem:[#allocation4 + $0x20] sm:$0xff]
    %v114 = vld [vmem:[#allocation4 + $0x28] sm:$0xff]
    %v115 = vld [vmem:[#allocation4 + $0x30] sm:$0xff]
    %v116 = vld [vmem:[#allocation4 + $0x38] sm:$0xff]
    %v117 = vld [vmem:[#allocation4 + $0x40] sm:$0xff]
    %v118 = vld [vmem:[#allocation4 + $0x48] sm:$0xff]
    %v119 = vld [vmem:[#allocation4 + $0x50] sm:$0xff]
    %v120 = vld [vmem:[#allocation4 + $0x58] sm:$0xff]
    %v121 = vld [vmem:[#allocation4 + $0x60] sm:$0xff]
    %v122 = vld [vmem:[#allocation4 + $0x68] sm:$0xff]
    %v123 = vld [vmem:[#allocation4 + $0x70] sm:$0xff]
    %v124 = vld [vmem:[#allocation4 + $0x78] sm:$0xff]
    %v125 = vld [vmem:[#allocation6] sm:$0xf]
    %v127 = vperm.slane %v125, 0
    %v128 = vperm.slane %v125, 1
    %v129 = vperm.slane %v125, 2
    %v130 = vperm.slane %v125, 3
    %vm135 = vcmask 261120
    %v137 = vsel %vm135, %v108, 0
    %139 = vmatpush.msra.mxu0 0.0
    %140 = vmatpush.msra.mxu0 0.0
    %141 = vmatpush.msra.mxu0 0.0
    %142 = vmatpush.msra.mxu0 0.0
    %143 = vmatpush.msra.mxu0 0.0
    %144 = vmatpush.msra.mxu0 0.0
    %145 = vmatpush.msra.mxu0 0.0
    %146 = vmatpush.msra.mxu0 0.0
    %147 = vmatpush.msra.mxu0 0.0
    %148 = vmatpush.msra.mxu0 0.0
    %149 = vmatpush.msra.mxu0 0.0
    %150 = vmatpush.msra.mxu0 0.0
    %151 = vmatpush.msra.mxu0 %v121
    %152 = vmatpush.msra.mxu0 %v117
    %153 = vmatpush.msra.mxu0 %v113
    %154 = vmatpush.msra.mxu0 %v109
    %155 = vmatmul.f32.gmra.mxu0 %v137
    %v156 = vpop.f32.mrf.mxu0
    %v157 = vadd.f32 %v127, %v156
    %158 = vdwg.mxu0
    %159 = vmatpush.msra.mxu0 0.0
    %160 = vmatpush.msra.mxu0 0.0
    %161 = vmatpush.msra.mxu0 0.0
    %162 = vmatpush.msra.mxu0 0.0
    %163 = vmatpush.msra.mxu0 0.0
    %164 = vmatpush.msra.mxu0 0.0
    %165 = vmatpush.msra.mxu0 0.0
    %166 = vmatpush.msra.mxu0 0.0
    %167 = vmatpush.msra.mxu0 0.0
    %168 = vmatpush.msra.mxu0 0.0
    %169 = vmatpush.msra.mxu0 0.0
    %170 = vmatpush.msra.mxu0 0.0
    %171 = vmatpush.msra.mxu0 %v122
    %172 = vmatpush.msra.mxu0 %v118
    %173 = vmatpush.msra.mxu0 %v114
    %174 = vmatpush.msra.mxu0 %v110
    %175 = vmatmul.f32.gmra.mxu0 %v137
    %v176 = vpop.f32.mrf.mxu0
    %v177 = vadd.f32 %v128, %v176
    %178 = vdwg.mxu0
    %179 = vmatpush.msra.mxu0 0.0
    %180 = vmatpush.msra.mxu0 0.0
    %181 = vmatpush.msra.mxu0 0.0
    %182 = vmatpush.msra.mxu0 0.0
    %183 = vmatpush.msra.mxu0 0.0
    %184 = vmatpush.msra.mxu0 0.0
    %185 = vmatpush.msra.mxu0 0.0
    %186 = vmatpush.msra.mxu0 0.0
    %187 = vmatpush.msra.mxu0 0.0
    %188 = vmatpush.msra.mxu0 0.0
    %189 = vmatpush.msra.mxu0 0.0
    %190 = vmatpush.msra.mxu0 0.0
    %191 = vmatpush.msra.mxu0 %v123
    %192 = vmatpush.msra.mxu0 %v119
    %193 = vmatpush.msra.mxu0 %v115
    %194 = vmatpush.msra.mxu0 %v111
    %195 = vmatmul.f32.gmra.mxu0 %v137
    %v196 = vpop.f32.mrf.mxu0
    %v197 = vadd.f32 %v129, %v196
    %198 = vdwg.mxu0
    %199 = vmatpush.msra.mxu0 0.0
    %200 = vmatpush.msra.mxu0 0.0
    %201 = vmatpush.msra.mxu0 0.0
    %202 = vmatpush.msra.mxu0 0.0
    %203 = vmatpush.msra.mxu0 0.0
    %204 = vmatpush.msra.mxu0 0.0
    %205 = vmatpush.msra.mxu0 0.0
    %206 = vmatpush.msra.mxu0 0.0
    %207 = vmatpush.msra.mxu0 0.0
    %208 = vmatpush.msra.mxu0 0.0
    %209 = vmatpush.msra.mxu0 0.0
    %210 = vmatpush.msra.mxu0 0.0
    %211 = vmatpush.msra.mxu0 %v124
    %212 = vmatpush.msra.mxu0 %v120
    %213 = vmatpush.msra.mxu0 %v116
    %214 = vmatpush.msra.mxu0 %v112
    %215 = vmatmul.f32.gmra.mxu0 %v137
    %v216 = vpop.f32.mrf.mxu0
    %v217 = vadd.f32 %v130, %v216
    %218 = vdwg.mxu0
    %v223 = vrot.slane %v177, 7
    %v224 = vrot.slane %v197, 6
    %v225 = vrot.slane %v217, 5
    %vm226 = vcmask 1040384
    %v227 = vsel %vm226, %v157, %v223
    %vm228 = vcmask 1042434
    %v229 = vsel %vm228, %v224, %v225
    %vm230 = vcmask 1041408
    %v231 = vsel %vm230, %v227, %v229
    %v233 = vlaneseq
    %vm234 = vcmp.ge.s32.totalorder %v233, 0
    %vm235 = vcmp.lt.s32.totalorder %v233, 512
    %vm236 = vmand %vm234, %vm235
    %237 = vst.msk [vmem:[%s6] sm:$0xf] %vm236, %v231
    %v238 = vand.u32 2147483647, %v177
    %v239 = vadd.f32 %v238, 1e-06
    %v240 = vrcp.pop %v239
    %v241 = vmul.f32 %v239, %v240
    %v242 = vsub.f32 1.0, %v241
    %v243 = vmul.f32 %v240, %v242
    %v244 = vadd.f32 %v240, %v243
    %vm245 = vweird.f32 %v239
    %vm246 = vweird.f32 %v240
    %vm247 = vmor %vm245, %vm246
    %v248 = vsel %vm247, %v240, %v244
    %v249 = vand.u32 2147483647, %v239
    %vm250 = vcmp.eq.f32.partialorder %v249, 8.507059e+37
    %v251 = vand.u32 %v239, 2147483648
    %v252 = vor.u32 1.1754944e-38, %v251
    %v253 = vsel %vm250, %v252, %v248
    %v254 = vmul.f32 1.0, %v253
    %v255 = vand.u32 2147483647, %v217
    %v256 = vadd.f32 %v255, 1e-06
    %v257 = vrcp.pop %v256
    %v258 = vmul.f32 %v256, %v257
    %v259 = vsub.f32 1.0, %v258
    %v260 = vmul.f32 %v257, %v259
    %v261 = vadd.f32 %v257, %v260
    %vm262 = vweird.f32 %v256
    %vm263 = vweird.f32 %v257
    %vm264 = vmor %vm262, %vm263
    %v265 = vsel %vm264, %v257, %v261
    %v266 = vand.u32 2147483647, %v256
    %vm267 = vcmp.eq.f32.partialorder %v266, 8.507059e+37
    %v268 = vand.u32 %v256, 2147483648
    %v269 = vor.u32 1.1754944e-38, %v268
    %v270 = vsel %vm267, %v269, %v265
    %v271 = vmul.f32 1.0, %v270
    %v272 = vlaneseq
    %v273 = vshrl.u32 %v272, 7
    %v274 = vlaneseq
    %v275 = vand.u32 %v274, 127
    %v276 = vmul.u32 %v273, 3
    %vm277 = vcmp.ge.s32.totalorder %v275, %v276
    %v278 = vadd.s32 %v276, 3
    %vm279 = vcmp.lt.s32.totalorder %v275, %v278
    %vm280 = vmand %vm277, %vm279
    %v281 = vsel %vm280, 1, 0
    %v282 = vcvt.s32.f32 %v281
    %v284 = vsel %vm75, %v282, 0
    %286 = vmatpush.msra.mxu0 0.0
    %287 = vmatpush.msra.mxu0 0.0
    %288 = vmatpush.msra.mxu0 0.0
    %289 = vmatpush.msra.mxu0 0.0
    %290 = vmatpush.msra.mxu0 0.0
    %291 = vmatpush.msra.mxu0 0.0
    %292 = vmatpush.msra.mxu0 0.0
    %293 = vmatpush.msra.mxu0 0.0
    %294 = vmatpush.msra.mxu0 0.0
    %295 = vmatpush.msra.mxu0 0.0
    %296 = vmatpush.msra.mxu0 0.0
    %297 = vmatpush.msra.mxu0 0.0
    %298 = vmatpush.msra.mxu0 0.0
    %299 = vmatpush.msra.mxu0 0.0
    %300 = vmatpush.msra.mxu0 0.0
    %301 = vmatpush.msra.mxu0 %v284
    %302 = vmatmul.f32.gmra.mxu0 %v73
    %v303 = vpop.f32.mrf.mxu0
    %v304 = vadd.f32 0.0, %v303
    %305 = vdwg.mxu0
    %v306 = vperm.slane %v157, 0
    %v307 = vsub.f32 %v304, %v306
    %v308 = vperm.slane %v254, 0
    %v309 = vmul.f32 %v307, %v308
    %v310 = vmul.f32 %v309, -0.5
    %v311 = vmul.f32 %v310, %v309
    %v312 = vmul.f32 %v311, 1.442695
    %v313 = vpow.pop %v312
    %v314 = vadd.s32 %v273, 8
    %vm315 = vcmp.lt.s32.totalorder %v275, 4
    %v316 = vsub.s32 %v275, 4
    %v317 = vsel %vm315, %v275, %v316
    %v318 = vmul.u32 %v317, 3
    %vm319 = vcmp.ge.s32.totalorder %v273, %v318
    %vm320 = vcmp.ge.s32.totalorder %v314, %v318
    %v321 = vadd.s32 %v318, 3
    %vm322 = vcmp.lt.s32.totalorder %v273, %v321
    %vm323 = vcmp.lt.s32.totalorder %v314, %v321
    %vm324 = vmand %vm319, %vm322
    %vm325 = vmand %vm320, %vm323
    %v326 = vsub.s32 %v273, %v318
    %v327 = vsub.s32 %v314, %v318
    %v328 = vcvt.s32.f32 %v326
    %v329 = vcvt.s32.f32 %v327
    %v330 = vsel %vm315, 1.0, %v328
    %v331 = vsel %vm315, 1.0, %v329
    %v332 = vsel %vm324, %v330, 0.0
    %v333 = vsel %vm325, %v331, 0.0
    %v334 = vmul.f32 %v313, 10.0
    %v335 = vmul.f32 %v334, 1.442695
    %v336 = vpow.pop %v335
    %vm337 = vcmask 97280
    %v339 = vsel %vm337, %v336, 0
    %v342 = vsel %vm75, %v333, 0
    %344 = vmatpush.msra.mxu0 0.0
    %345 = vmatpush.msra.mxu0 0.0
    %346 = vmatpush.msra.mxu0 0.0
    %347 = vmatpush.msra.mxu0 0.0
    %348 = vmatpush.msra.mxu0 0.0
    %349 = vmatpush.msra.mxu0 0.0
    %350 = vmatpush.msra.mxu0 0.0
    %351 = vmatpush.msra.mxu0 0.0
    %352 = vmatpush.msra.mxu0 0.0
    %353 = vmatpush.msra.mxu0 0.0
    %354 = vmatpush.msra.mxu0 0.0
    %355 = vmatpush.msra.mxu0 0.0
    %356 = vmatpush.msra.mxu0 0.0
    %357 = vmatpush.msra.mxu0 0.0
    %358 = vmatpush.msra.mxu0 %v342
    %359 = vmatpush.msra.mxu0 %v332
    %360 = vmatmul.f32.gmra.mxu0 %v339
    %v361 = vpop.f32.mrf.mxu0
    %v362 = vadd.f32 0.0, %v361
    %363 = vdwg.mxu0
    %v364 = vrcp.pop %v362
    %366 = vrot.lane.b32.xlu0 %v364, 4
    %v367 = vpop.permute.xlu0 %366
    %v369 = vmul.f32 %v362, %v367
    %v370 = vperm.slane %v197, 0
    %372 = vrot.lane.b32.xlu0 %v370, 4
    %v373 = vpop.permute.xlu0 %372
    %v375 = vsub.f32 %v369, %v373
    %v376 = vperm.slane %v271, 0
    %378 = vrot.lane.b32.xlu0 %v376, 4
    %v379 = vpop.permute.xlu0 %378
    %v381 = vmul.f32 %v375, %v379
    %v382 = vmul.f32 %v381, %v381
    %384 = vrot.lane.b32.xlu0 %v382, 124
    %v385 = vpop.permute.xlu0 %384
    %vm387 = vcmask 25600
    %v388 = vsel %vm387, %v385, 0.0
    %389 = vadd.xlane.f32.xlu0 %v388
    %v390 = vpop.xlane.xlu0 %389
    %v391 = vmul.f32 %v390, -0.5
    %v392 = vmul.f32 %v391, 1.442695
    %v393 = vpow.pop %v392
    %v394 = vsub.f32 %v369, %v370
    %v395 = vmul.f32 %v394, %v376
    %v396 = vmul.f32 %v395, %v395
    %398 = vrot.lane.b32.xlu0 %v396, 124
    %v399 = vpop.permute.xlu0 %398
    %v401 = vsel %vm387, %v399, 0.0
    %402 = vadd.xlane.f32.xlu0 %v401
    %v403 = vpop.xlane.xlu0 %402
    %v404 = vmul.f32 %v403, -0.5
    %v405 = vmul.f32 %v404, 1.442695
    %v406 = vpow.pop %v405
    %v407 = vadd.f32 %v393, %v406
    %408 = vrot.lane.b32.xlu0 %v370, 124
    %v409 = vpop.permute.xlu0 %408
    %v411 = vsub.f32 %v369, %v409
    %412 = vrot.lane.b32.xlu0 %v376, 124
    %v413 = vpop.permute.xlu0 %412
    %v415 = vmul.f32 %v411, %v413
    %v416 = vmul.f32 %v415, %v415
    %418 = vrot.lane.b32.xlu0 %v416, 124
    %v419 = vpop.permute.xlu0 %418
    %v421 = vsel %vm387, %v419, 0.0
    %422 = vadd.xlane.f32.xlu0 %v421
    %v423 = vpop.xlane.xlu0 %422
    %v424 = vmul.f32 %v423, -0.5
    %v425 = vmul.f32 %v424, 1.442695
    %v426 = vpow.pop %v425
    %427 = vrot.lane.b32.xlu0 %v370, 120
    %v428 = vpop.permute.xlu0 %427
    %v430 = vsub.f32 %v369, %v428
    %431 = vrot.lane.b32.xlu0 %v376, 120
    %v432 = vpop.permute.xlu0 %431
    %v434 = vmul.f32 %v430, %v432
    %v435 = vmul.f32 %v434, %v434
    %437 = vrot.lane.b32.xlu0 %v435, 124
    %v438 = vpop.permute.xlu0 %437
    %v440 = vsel %vm387, %v438, 0.0
    %441 = vadd.xlane.f32.xlu0 %v440
    %v442 = vpop.xlane.xlu0 %441
    %v443 = vmul.f32 %v442, -0.5
    %v444 = vmul.f32 %v443, 1.442695
    %v445 = vpow.pop %v444
    %v446 = vadd.f32 %v426, %v445
    %v447 = vmax.f32 %v407, %v446
    %v448 = vsub.f32 %v407, %v447
    %v449 = vmul.f32 %v448, 1.442695
    %v450 = vpow.pop %v449
    %v451 = vsub.f32 %v446, %v447
    %v452 = vmul.f32 %v451, 1.442695
    %v453 = vpow.pop %v452
    %v454 = vadd.f32 %v450, %v453
    %v455 = vrcp.pop %v454
    %v456 = vmul.f32 %v450, %v455
    %v457 = vmul.f32 %v453, %v455
    %v458 = vmul.f32 %v456, 10.0
    %v459 = vmul.f32 %v458, 1.442695
    %v460 = vpow.pop %v459
    %v461 = vmul.f32 %v457, 10.0
    %v462 = vmul.f32 %v461, 1.442695
    %v463 = vpow.pop %v462
    %v464 = vadd.f32 %v460, %v463
    %v465 = vadd.f32 %v463, 0.0
    %v466 = vrcp.pop %v464
    %v467 = vmul.f32 %v465, %v466
    %vm468 = vcmp.eq.s32.totalorder %v275, 0
    %v469 = vsel %vm468, %v467, 0.0
    %470 = vst [vmem:[%s5] sm:$0x3] %v469
    // Predicated region
    $region34: #{binary_fnet_forward.1} parent=1 // pred_check
      _
    $region35: #{binary_fnet_forward.1} parent=1 // pred_check_branch
      %472 = sbr.rel (0) target = $region37
    $region36: #{binary_fnet_forward.1} parent=1 // pred_region
      _
    $region37: #{binary_fnet_forward.1} parent=1 // pred_fallthru
      _
    // Predicated region
    $region38: #{binary_fnet_forward.1} parent=1 // pred_check
      _
    $region39: #{binary_fnet_forward.1} parent=1 // pred_check_branch
      %474 = sbr.rel (0) target = $region41
    $region40: #{binary_fnet_forward.1} parent=1 // pred_region
      _
    $region41: #{binary_fnet_forward.1} parent=1 // pred_fallthru
      _
    // Predicated region
    $region42: #{binary_fnet_forward.1} parent=1 // pred_check
      _
    $region43: #{binary_fnet_forward.1} parent=1 // pred_check_branch
      %476 = sbr.rel (0) target = $region45
    $region44: #{binary_fnet_forward.1} parent=1 // pred_region
      _
    $region45: #{binary_fnet_forward.1} parent=1 // pred_fallthru
      _
    // Predicated region
    $region46: #{binary_fnet_forward.1} parent=1 // pred_check
      _
    $region47: #{binary_fnet_forward.1} parent=1 // pred_check_branch
      %478 = sbr.rel (0) target = $region49
    $region48: #{binary_fnet_forward.1} parent=1 // pred_region
      _
    $region49: #{binary_fnet_forward.1} parent=1 // pred_fallthru
      _
    %479 = vsyncpa [#allocation3], 1
    %480 = vsyncpa [#allocation5], 1

</llo_original>
